<compile_context>
chip_gen: v7x
topology: tpu7x:2x2x1
jax: 0.10.0
libtpu: 0.0.40
codegen_flags: <defaults>
</compile_context>

<pallas_src>
import functools

import jax
import jax.numpy as jnp
from jax.experimental import pallas as pl
from jax.experimental.pallas import tpu as pltpu

_LANES = 128
_MIB = 1024 * 1024
_MIN_PALLAS_ELEMENTS = 1 << 20   # below this, a fused XLA reduction wins


@functools.lru_cache(maxsize=None)
def _tpu_vmem_bytes() -> int:
    """Per-TensorCore VMEM capacity (conservative fallback: 64 MiB = v7x)."""
    try:
        phys = int(getattr(pltpu.get_tpu_info(), "vmem_capacity_bytes", 0))
        if phys > 0:
            return phys
    except Exception:
        pass
    return 64 * _MIB


@functools.lru_cache(maxsize=None)
def _num_tensorcores() -> int:
    """TensorCores a single pallas_call can spread a 'parallel' axis over."""
    try:
        info = pltpu.get_tpu_info()
        for name in ("num_cores", "num_tensorcores", "tensorcores_per_chip",
                     "cores_per_chip", "core_count"):
            v = getattr(info, name, None)
            if isinstance(v, int) and 1 <= v <= 8:
                return v
    except Exception:
        pass
    try:
        kind = jax.devices()[0].device_kind.lower()
        if "7" in kind:                     # v7x: 2 TensorCores per chip
            return 2
        if "v4" in kind or "v5p" in kind:   # megacore chips
            return 2
    except Exception:
        pass
    return 1                                # v5e / v6e / unknown


def _sq_err_partial_kernel(yhat_ref, y_ref, out_ref, *, rows, tile_rows,
                           acc_rows, tiles_per_shard, tiles_full,
                           needs_edge_mask):
    """out_ref (acc_rows, 128) += folded (yhat - y)^2 for this input tile."""
    s = pl.program_id(0)     # shard axis ("parallel", one per TensorCore)
    i = pl.program_id(1)     # tile-within-shard axis ("arbitrary", sequential)

    @pl.when(i == 0)
    def _init():
        out_ref[...] = jnp.zeros_like(out_ref)

    # Cast in-register so bf16/f16 inputs stream at half the HBM bytes.
    d = yhat_ref[...].astype(jnp.float32) - y_ref[...].astype(jnp.float32)
    sq = d * d

    def fold(x):
        # (tile_rows, 128) -> (acc_rows, 128): layout-preserving reshape
        # (splits the sublane-major dim at a multiple of 8) + cheap VPU adds.
        if tile_rows == acc_rows:
            return x
        return jnp.sum(x.reshape(tile_rows // acc_rows, acc_rows, _LANES),
                       axis=0)

    if not needs_edge_mask:
        out_ref[...] += fold(sq)
    else:
        t = s * tiles_per_shard + i   # unclamped global tile index

        @pl.when(t < tiles_full)      # interior tiles: mask-free fast path
        def _interior():
            out_ref[...] += fold(sq)

        @pl.when(t >= tiles_full)     # partial last tile / clamped duplicates
        def _edge():
            row = jax.lax.broadcasted_iota(jnp.int32, (tile_rows, _LANES), 0)
            global_row = t * tile_rows + row
            out_ref[...] += fold(jnp.where(global_row < rows, sq, 0.0))


def _sum_sq_err_pallas(yh2, yy2, rows):
    """sum((yh2 - yy2)^2) over a lane-dense (rows, 128) pair via Pallas."""
    itemsize = jnp.dtype(yh2.dtype).itemsize
    vmem_phys = _tpu_vmem_bytes()
    vmem_limit = max(32 * _MIB, min(64 * _MIB, (vmem_phys * 3) // 4))
    # Per-input streaming block budget: 2 inputs x 2 pipeline buffers + the
    # small accumulator must sit comfortably under the scoped-VMEM limit.
    max_block_bytes = 8 * _MIB if vmem_phys >= 96 * _MIB else 4 * _MIB
    cap_rows = max(8, max_block_bytes // (_LANES * itemsize))

    num_shards = _num_tensorcores()
    if num_shards > 1 and rows < 256:
        num_shards = 1           # not enough work to amortize a second stream

    # Sublane alignment of the packed tile for this dtype (8/16/32 rows).
    sub = max(8, 32 // itemsize)
    # Keep the pipeline in steady state: aim for >= ~4 tiles per shard.
    target = pl.cdiv(rows, 4 * num_shards)
    tile_rows = max(sub, min(cap_rows, target))
    tile_rows = pl.cdiv(tile_rows, sub) * sub

    # Fixed-size accumulator decoupled from tile_rows (always a multiple of 8).
    acc_rows = tile_rows
    for cand in (64, 32, 16, 8):
        if tile_rows % cand == 0:
            acc_rows = cand
            break

    tiles_total = pl.cdiv(rows, tile_rows)
    tiles_per_shard = pl.cdiv(tiles_total, num_shards)
    tiles_full = rows // tile_rows            # tiles with no out-of-bounds rows
    needs_clamp = num_shards * tiles_per_shard > tiles_total
    needs_edge_mask = needs_clamp or (rows % tile_rows != 0)

    def in_index_map(s, i):
        t = s * tiles_per_shard + i
        if needs_clamp:
            # Keep the DMA in-bounds; the kernel masks the duplicate to zero.
            t = jnp.minimum(t, tiles_total - 1)
        return (t, 0)

    kernel = functools.partial(
        _sq_err_partial_kernel,
        rows=rows, tile_rows=tile_rows, acc_rows=acc_rows,
        tiles_per_shard=tiles_per_shard, tiles_full=tiles_full,
        needs_edge_mask=needs_edge_mask,
    )

    partial_sums = pl.pallas_call(
        kernel,
        out_shape=jax.ShapeDtypeStruct((num_shards * acc_rows, _LANES),
                                       jnp.float32),
        grid=(num_shards, tiles_per_shard),
        in_specs=[
            pl.BlockSpec((tile_rows, _LANES), in_index_map),
            pl.BlockSpec((tile_rows, _LANES), in_index_map),
        ],
        out_specs=pl.BlockSpec((acc_rows, _LANES), lambda s, i: (s, 0)),
        compiler_params=pltpu.CompilerParams(
            dimension_semantics=("parallel", "arbitrary"),
            vmem_limit_bytes=vmem_limit,
        ),
    )(yh2, yy2)

    # Tiny final reduce in XLA (at most num_shards * acc_rows * 128 floats).
    return jnp.sum(partial_sums, dtype=jnp.float32)


def rmse_loss(yhat: jax.Array, y: jax.Array, *,
              min_pallas_elements: int = _MIN_PALLAS_ELEMENTS) -> jax.Array:
    """RMSE over all elements, matching torch.sqrt(nn.MSELoss()(yhat, y))."""
    assert yhat.shape == y.shape, (yhat.shape, y.shape)
    n = yhat.size
    if n == 0:
        return jnp.float32(jnp.nan)   # torch: mean of an empty tensor is NaN

    yh = yhat.reshape(-1)
    yy = y.reshape(-1)
    if (not jnp.issubdtype(yh.dtype, jnp.floating)
            or jnp.dtype(yh.dtype).itemsize > 4):
        yh = yh.astype(jnp.float32)
        yy = yy.astype(jnp.float32)

    rows = n // _LANES
    n_full = rows * _LANES

    if rows == 0 or n < min_pallas_elements:
        # Tiny input: a fused XLA reduction beats any kernel launch.
        d = yh.astype(jnp.float32) - yy.astype(jnp.float32)
        return jnp.sqrt(jnp.sum(d * d) / jnp.float32(n))

    # 128-aligned prefix streams through the Pallas kernel (no full-array
    # jnp.pad); aligned inputs incur zero extra copies (reshape is free).
    if n_full == n:
        yh2 = yh.reshape(rows, _LANES)
        yy2 = yy.reshape(rows, _LANES)
    else:
        yh2 = yh[:n_full].reshape(rows, _LANES)
        yy2 = yy[:n_full].reshape(rows, _LANES)

    total = _sum_sq_err_pallas(yh2, yy2, rows)

    if n_full != n:
        # <128-element ragged tail: negligible, reduce in plain jnp.
        td = yh[n_full:].astype(jnp.float32) - yy[n_full:].astype(jnp.float32)
        total = total + jnp.sum(td * td)

    return jnp.sqrt(total / jnp.float32(n))


if __name__ == "__main__":
    key = jax.random.PRNGKey(0)
    k1, k2, k3, k4 = jax.random.split(key, 4)

    # Small, lane-aligned NCHW-style pair -> forced through the Pallas kernel.
    yhat = jax.random.normal(k1, (2, 4, 16, 16), dtype=jnp.float32)
    y = jax.random.normal(k2, (2, 4, 16, 16), dtype=jnp.float32)
    loss = jax.block_until_ready(rmse_loss(yhat, y, min_pallas_elements=0))
    ref = jnp.sqrt(jnp.mean((yhat - y) ** 2))
    assert jnp.allclose(loss, ref, rtol=1e-5, atol=1e-6), (loss, ref)

    # Ragged shape: exercises the aligned-prefix + jnp-tail split and the
    # pl.when-gated edge-tile mask inside the kernel.
    yhat2 = jax.random.normal(k3, (3, 5, 7, 11), dtype=jnp.float32)
    y2 = jax.random.normal(k4, (3, 5, 7, 11), dtype=jnp.float32)
    loss2 = jax.block_until_ready(rmse_loss(yhat2, y2, min_pallas_elements=0))
    ref2 = jnp.sqrt(jnp.mean((yhat2 - y2) ** 2))
    assert jnp.allclose(loss2, ref2, rtol=1e-5, atol=1e-6), (loss2, ref2)

    # Default threshold: tiny inputs take the fused-XLA fallback path.
    loss3 = jax.block_until_ready(rmse_loss(yhat2, y2))
    assert jnp.allclose(loss3, ref2, rtol=1e-5, atol=1e-6), (loss3, ref2)

    print("KERNEL_OK")
</pallas_src>

<mosaic_0001>
module attributes {stable_mosaic.version = 11 : i64} {
  func.func @_sq_err_partial_kernel(%arg0: i32, %arg1: i32, %arg2: memref<8x128xf32, #tpu.memory_space<vmem>>, %arg3: memref<8x128xf32, #tpu.memory_space<vmem>>, %arg4: memref<8x128xf32, #tpu.memory_space<vmem>>) attributes {dimension_semantics = [#tpu.dimension_semantics<parallel>, #tpu.dimension_semantics<arbitrary>], iteration_bounds = array<i64: 1, 2>, scalar_prefetch = 0 : i64, scratch_operands = 0 : i64, tpu.core_type = #tpu.core_type<tc>, window_params = [{transform_indices = @transform_0, window_bounds = array<i64: 8, 128>}, {transform_indices = @transform_1, window_bounds = array<i64: 8, 128>}, {transform_indices = @transform_2, window_bounds = array<i64: 8, 128>}]} {
    %c0_i32 = arith.constant 0 : i32
    %0 = arith.cmpi eq, %arg1, %c0_i32 : i32
    %1 = arith.extui %0 : i1 to i32
    %c0_i32_0 = arith.constant 0 : i32
    %2 = arith.cmpi ne, %1, %c0_i32_0 : i32
    scf.if %2 {
      %cst = arith.constant 0.000000e+00 : f32
      %10 = vector.broadcast %cst : f32 to vector<8x128xf32>
      %c0_8 = arith.constant 0 : index
      %c0_9 = arith.constant 0 : index
      %11 = vector.load %arg4[%c0_8, %c0_9] : memref<8x128xf32, #tpu.memory_space<vmem>>, vector<8x128xf32>
      tpu.vector_store %arg4[%c0_8, %c0_9], %10 {strides = array<i32>} : memref<8x128xf32, #tpu.memory_space<vmem>>, vector<8x128xf32>,
    } else {
    }
    %c0 = arith.constant 0 : index
    %c0_1 = arith.constant 0 : index
    %3 = vector.load %arg2[%c0, %c0_1] : memref<8x128xf32, #tpu.memory_space<vmem>>, vector<8x128xf32>
    %c0_2 = arith.constant 0 : index
    %c0_3 = arith.constant 0 : index
    %4 = vector.load %arg3[%c0_2, %c0_3] : memref<8x128xf32, #tpu.memory_space<vmem>>, vector<8x128xf32>
    %5 = arith.subf %3, %4 : vector<8x128xf32>
    %6 = arith.mulf %5, %5 : vector<8x128xf32>
    %c0_4 = arith.constant 0 : index
    %c0_5 = arith.constant 0 : index
    %7 = vector.load %arg4[%c0_4, %c0_5] : memref<8x128xf32, #tpu.memory_space<vmem>>, vector<8x128xf32>
    %8 = arith.addf %7, %6 : vector<8x128xf32>
    %c0_6 = arith.constant 0 : index
    %c0_7 = arith.constant 0 : index
    %9 = vector.load %arg4[%c0_6, %c0_7] : memref<8x128xf32, #tpu.memory_space<vmem>>, vector<8x128xf32>
    tpu.vector_store %arg4[%c0_6, %c0_7], %8 {strides = array<i32>} : memref<8x128xf32, #tpu.memory_space<vmem>>, vector<8x128xf32>,
    return
  }
  func.func @transform_0(%arg0: i32, %arg1: i32) -> (i32, i32) {
    %c2_i32 = arith.constant 2 : i32
    %0 = arith.muli %arg0, %c2_i32 : i32
    %1 = arith.addi %0, %arg1 : i32
    %c0_i32 = arith.constant 0 : i32
    %c0_i32_0 = arith.constant 0 : i32
    return %1, %c0_i32 : i32, i32
  }
  func.func @transform_1(%arg0: i32, %arg1: i32) -> (i32, i32) {
    %c2_i32 = arith.constant 2 : i32
    %0 = arith.muli %arg0, %c2_i32 : i32
    %1 = arith.addi %0, %arg1 : i32
    %c0_i32 = arith.constant 0 : i32
    %c0_i32_0 = arith.constant 0 : i32
    return %1, %c0_i32 : i32, i32
  }
  func.func @transform_2(%arg0: i32, %arg1: i32) -> (i32, i32) {
    %c0_i32 = arith.constant 0 : i32
    %c0_i32_0 = arith.constant 0 : i32
    return %arg0, %c0_i32 : i32, i32
  }
}

</mosaic_0001>

<llo_original>
// kernel: tpu_custom_call.1
$region0: #{tpu_custom_call.1}
  #allocation0 [shape = 'u32[]', space=smem, size = 0x4, offset = 0x4, fixed_abs, tag = 'smem constant byte address 0x4 - core index']
  #allocation1 [shape = 'u32[144,128]{1,0:T(1,128)}', space=vmem, size = 0x12000, scoped, tag = 'internal scratch']
  %s0 = inlined_call_operand.hbm [shape: f32[16,128], index: 0, kind: input, shape index: {}]
  %s1 = inlined_call_operand.hbm [shape: f32[16,128], index: 1, kind: input, shape index: {}]
  %s2 = inlined_call_operand.hbm [shape: f32[8,128], index: 2, kind: output, shape index: {}]
  %s3 = sld [smem:[#allocation0]]
  $region53: #{tpu_custom_call.1} parent=0
    _
  %s5 = ssub.s32 1, %s3
  %s6 = scalar_select 0, %s5, %s3
  $region1: #{tpu_custom_call.1} parent=0
    #allocation2 [shape = 'u8[8192]{0}', space=vmem, size = 0x2000, scoped, tag = 'input window, operand 0']
    #allocation3 [shape = 's32[2]{0}', space=sflag, size = 0x8, scoped, tag = 'scoped memory for tpu_custom_call.1']
    #allocation4 [shape = 's32[2]{0}', space=sflag, size = 0x8, scoped, tag = 'scoped memory for tpu_custom_call.1']
    #allocation5 [shape = 'u8[8192]{0}', space=vmem, size = 0x2000, scoped, tag = 'input window, operand 1']
    #allocation6 [shape = 's32[2]{0}', space=sflag, size = 0x8, scoped, tag = 'scoped memory for tpu_custom_call.1']
    #allocation7 [shape = 'u8[4096]{0}', space=vmem, size = 0x1000, scoped, tag = 'output window, operand 0, single buffered']
    %7 = vsyncpa [#allocation3], 0
    %s8 = scalar_lea.sflag [#allocation3], 1
    %9 = vsyncpa %s8, 0
    %10 = vsyncpa [#allocation6], 0
    %s11 = scalar_lea.sflag [#allocation6], 1
    %12 = vsyncpa %s11, 0
    %13 = vsyncpa [#allocation4], 0
    loop: start=0, step=1, limit=4
    $region2: #{tpu_custom_call.1} parent=1 // loop_pre_header
      _
    $region3: #{tpu_custom_call.1} parent=1 // loop_header
      %s15 = sphi 0, %s19
      %p16 = scmp.ge.s32.totalorder %s15, 4
      %s22 = sphi 0, %s34
      %s23 = sphi 0, %s30
      %s24 = sphi 0, %s22
      %s25 = sphi 0, %s23
      %s26 = sphi 0, %s24
      %s27 = sphi 0, %s25
      %s41 = sphi 0, %s43
      %s44 = sphi 0, %s41
      %s45 = sphi 0, %s44
      %s61 = sphi 0, %s45
      %s71 = sphi 0, %s73
      %s74 = sphi 0, %s71
      %s75 = sphi 0, %s74
      %s91 = sphi 0, %s75
      %s97 = sphi 0, %s99
      %s100 = sphi 0, %s97
      %s101 = sphi 0, %s100
      %s117 = sphi 0, %s101
    $region4: #{tpu_custom_call.1} parent=1 // loop_header_branch
      %18 = sbr.rel (%p16) target = $region8
    $region5: #{tpu_custom_call.1} parent=1 // loop_body
      %s20 = ssub.s32 %s15, 1
      %s21 = ssub.s32 %s15, 2
      %s28 = sadd.s32 1, %s23
      %p29 = scmp.ge.s32.totalorder %s28, 2
      %s30 = scalar_select %p29, 0, %s28
      %s31 = sadd.s32 1, %s22
      %s32 = scalar_select %p29, %s31, %s22
      %p33 = scmp.ge.s32.totalorder %s32, 1
      %s34 = scalar_select %p33, 0, %s32
      %s35 = smul.u32 %s22, 2
      %s36 = sadd.s32 %s35, %s23
      %s37 = smul.u32 %s34, 2
      %s38 = sadd.s32 %s37, %s30
      %s39 = ssub.s32 %s36, %s38
      %p40 = scmp.eq.s32.totalorder %s39, 0
      %s42 = sadd.s32 %s41, 1
      %s43 = scalar_select %p40, %s41, %s42
      %p46 = pneg %p40
      %p47 = scmp.eq.s32.totalorder %s15, 1
      %p48 = por %p46, %p47
      %p49 = scmp.ne.s32.totalorder %s41, %s44
      %p50 = scmp.eq.s32.totalorder %s15, 0
      %p51 = por %p49, %p50
      %p52 = scmp.ne.s32.totalorder %s41, %s44
      %p53 = scmp.eq.s32.totalorder %s20, 1
      %p54 = por %p52, %p53
      %p55 = scmp.ne.s32.totalorder %s44, %s45
      %p56 = scmp.eq.s32.totalorder %s20, 0
      %p57 = por %p55, %p56
      %p58 = scmp.ne.s32.totalorder %s44, %s45
      %p59 = scmp.eq.s32.totalorder %s21, 1
      %p60 = por %p58, %p59
      %p62 = scmp.ne.s32.totalorder %s45, %s61
      %p63 = scmp.eq.s32.totalorder %s21, 0
      %p64 = por %p62, %p63
      %s65 = smul.u32 %s22, 2
      %s66 = sadd.s32 %s65, %s23
      %s67 = smul.u32 %s34, 2
      %s68 = sadd.s32 %s67, %s30
      %s69 = ssub.s32 %s66, %s68
      %p70 = scmp.eq.s32.totalorder %s69, 0
      %s72 = sadd.s32 %s71, 1
      %s73 = scalar_select %p70, %s71, %s72
      %p76 = pneg %p70
      %p77 = scmp.eq.s32.totalorder %s15, 1
      %p78 = por %p76, %p77
      %p79 = scmp.ne.s32.totalorder %s71, %s74
      %p80 = scmp.eq.s32.totalorder %s15, 0
      %p81 = por %p79, %p80
      %p82 = scmp.ne.s32.totalorder %s71, %s74
      %p83 = scmp.eq.s32.totalorder %s20, 1
      %p84 = por %p82, %p83
      %p85 = scmp.ne.s32.totalorder %s74, %s75
      %p86 = scmp.eq.s32.totalorder %s20, 0
      %p87 = por %p85, %p86
      %p88 = scmp.ne.s32.totalorder %s74, %s75
      %p89 = scmp.eq.s32.totalorder %s21, 1
      %p90 = por %p88, %p89
      %p92 = scmp.ne.s32.totalorder %s75, %s91
      %p93 = scmp.eq.s32.totalorder %s21, 0
      %p94 = por %p92, %p93
      %s95 = ssub.s32 %s22, %s34
      %p96 = scmp.eq.s32.totalorder %s95, 0
      %s98 = sadd.s32 %s97, 1
      %s99 = scalar_select %p96, %s97, %s98
      %p102 = pneg %p96
      %p103 = scmp.eq.s32.totalorder %s15, 1
      %p104 = por %p102, %p103
      %p105 = scmp.ne.s32.totalorder %s97, %s100
      %p106 = scmp.eq.s32.totalorder %s15, 0
      %p107 = por %p105, %p106
      %p108 = scmp.ne.s32.totalorder %s97, %s100
      %p109 = scmp.eq.s32.totalorder %s20, 1
      %p110 = por %p108, %p109
      %p111 = scmp.ne.s32.totalorder %s100, %s101
      %p112 = scmp.eq.s32.totalorder %s20, 0
      %p113 = por %p111, %p112
      %p114 = scmp.ne.s32.totalorder %s100, %s101
      %p115 = scmp.eq.s32.totalorder %s21, 1
      %p116 = por %p114, %p115
      %p118 = scmp.ne.s32.totalorder %s101, %s117
      %p119 = scmp.eq.s32.totalorder %s21, 0
      %p120 = por %p118, %p119
      %p121 = scmp.le.s32.totalorder 1, %s15
      %p122 = scmp.lt.s32.totalorder %s15, 3
      %p123 = pnand %p121, %p122
      %p124 = pneg %p123
      // Predicated region
      $region9: #{tpu_custom_call.1} parent=5 // pred_check
        _
      $region10: #{tpu_custom_call.1} parent=5 // pred_check_branch
        %126 = sbr.rel (%p123) target = $region12
      $region11: #{tpu_custom_call.1} parent=5 // pred_region
        %s127 = ssub.s32 %s15, 1
      $region12: #{tpu_custom_call.1} parent=5 // pred_fallthru
        _
      %p128 = scmp.lt.s32.totalorder %s15, 2
      // Predicated region
      $region13: #{tpu_custom_call.1} parent=5 // pred_check
        %p129 = pneg %p128
      $region14: #{tpu_custom_call.1} parent=5 // pred_check_branch
        %131 = sbr.rel (%p129) target = $region16
      $region15: #{tpu_custom_call.1} parent=5 // pred_region
        // Predicated region
        $region17: #{tpu_custom_call.1} parent=15 // pred_check
          %p132 = pneg %p51
        $region18: #{tpu_custom_call.1} parent=15 // pred_check_branch
          %134 = sbr.rel (%p132) target = $region20
        $region19: #{tpu_custom_call.1} parent=15 // pred_region
          %s135 = sand.u32 %s41, 1
          %s136 = scalar_lea.sflag [#allocation3], %s135
          %s137 = sand.u32 %s41, 1
          %s138 = smul.addr %s137, 8
          %s139 = scalar_lea.vmem [#allocation2], %s138
          %s140 = smul.u32 %s22, 2
          %s141 = sadd.s32 %s140, %s23
          %s143 = ssub.s32 128, 128
          %144 = vsyncadd %s136, %s143
          %s145 = smul.addr %s141, 128
          %s146 = scalar_lea.hbm %s0, %s145
          %s148 = sshll.u32 %s139, 4
          %s149 = int_to_ptr.vmem [resolvable:$true] %s148
          %151 = dma.hbm_to_vmem [thread:$0]  %s146, 128, %s149, %s136
        $region20: #{tpu_custom_call.1} parent=15 // pred_fallthru
          _
        // Predicated region
        $region21: #{tpu_custom_call.1} parent=15 // pred_check
          %p152 = pneg %p81
        $region22: #{tpu_custom_call.1} parent=15 // pred_check_branch
          %154 = sbr.rel (%p152) target = $region24
        $region23: #{tpu_custom_call.1} parent=15 // pred_region
          %s155 = sand.u32 %s71, 1
          %s156 = scalar_lea.sflag [#allocation6], %s155
          %s157 = sand.u32 %s71, 1
          %s158 = smul.addr %s157, 8
          %s159 = scalar_lea.vmem [#allocation5], %s158
          %s160 = smul.u32 %s22, 2
          %s161 = sadd.s32 %s160, %s23
          %s163 = ssub.s32 128, 128
          %164 = vsyncadd %s156, %s163
          %s165 = smul.addr %s161, 128
          %s166 = scalar_lea.hbm %s1, %s165
          %s168 = sshll.u32 %s159, 4
          %s169 = int_to_ptr.vmem [resolvable:$true] %s168
          %171 = dma.hbm_to_vmem [thread:$0]  %s166, 128, %s169, %s156
        $region24: #{tpu_custom_call.1} parent=15 // pred_fallthru
          _
      $region16: #{tpu_custom_call.1} parent=5 // pred_fallthru
        _
      %p172 = scmp.le.s32.totalorder 1, %s15
      %p173 = scmp.lt.s32.totalorder %s15, 3
      %p174 = pnand %p172, %p173
      %p175 = pneg %p174
      // Predicated region
      $region25: #{tpu_custom_call.1} parent=5 // pred_check
        _
      $region26: #{tpu_custom_call.1} parent=5 // pred_check_branch
        %177 = sbr.rel (%p174) target = $region28
      $region27: #{tpu_custom_call.1} parent=5 // pred_region
        %s178 = ssub.s32 %s15, 1
        %s179 = sand.u32 %s44, 1
        %s180 = scalar_lea.sflag [#allocation3], %s179
        %s181 = sand.u32 %s44, 1
        %s182 = smul.addr %s181, 8
        %s183 = scalar_lea.vmem [#allocation2], %s182
        // Predicated region
        $region29: #{tpu_custom_call.1} parent=27 // pred_check
          %p184 = pneg %p57
        $region30: #{tpu_custom_call.1} parent=27 // pred_check_branch
          %186 = sbr.rel (%p184) target = $region32
        $region31: #{tpu_custom_call.1} parent=27 // pred_region
          %187 = dma.done %s180, 128
        $region32: #{tpu_custom_call.1} parent=27 // pred_fallthru
          _
        %s188 = sand.u32 %s74, 1
        %s189 = scalar_lea.sflag [#allocation6], %s188
        %s190 = sand.u32 %s74, 1
        %s191 = smul.addr %s190, 8
        %s192 = scalar_lea.vmem [#allocation5], %s191
        // Predicated region
        $region33: #{tpu_custom_call.1} parent=27 // pred_check
          %p193 = pneg %p87
        $region34: #{tpu_custom_call.1} parent=27 // pred_check_branch
          %195 = sbr.rel (%p193) target = $region36
        $region35: #{tpu_custom_call.1} parent=27 // pred_region
          %196 = dma.done %s189, 128
        $region36: #{tpu_custom_call.1} parent=27 // pred_fallthru
          _
        %s197 = sand.u32 %s44, 1
        %s198 = scalar_lea.sflag [#allocation3], %s197
        %s199 = sand.u32 %s44, 1
        %s200 = smul.addr %s199, 8
        %s201 = scalar_lea.vmem [#allocation2], %s200
        %p202 = pneg %p57
        %p203 = pneg %p54
        %s204 = sand.u32 %s74, 1
        %s205 = scalar_lea.sflag [#allocation6], %s204
        %s206 = sand.u32 %s74, 1
        %s207 = smul.addr %s206, 8
        %s208 = scalar_lea.vmem [#allocation5], %s207
        %p209 = pneg %p87
        %p210 = pneg %p84
        %p211 = pneg %p113
        %p212 = pneg %p110
        %s213 = smul.u32 %s24, 2
        %s214 = sadd.s32 %s213, %s25
        %s215 = smul.u32 %s24, 2
        %s216 = sadd.s32 %s215, %s25
        %p217 = scmp.eq.s32.totalorder %s25, 0
        // Predicated region
        $region37: #{tpu_custom_call.1} parent=27 // pred_check
          %p218 = pneg %p217
        $region38: #{tpu_custom_call.1} parent=27 // pred_check_branch
          %220 = sbr.rel (%p218) target = $region40
        $region39: #{tpu_custom_call.1} parent=27 // pred_region
          %221 = vst [vmem:[#allocation7] sm:$0xff] 0.0
        $region40: #{tpu_custom_call.1} parent=27 // pred_fallthru
          _
        %v222 = vld [vmem:[%s183] sm:$0xff]
        %v223 = vld [vmem:[%s192] sm:$0xff]
        %v224 = vsub.f32 %v222, %v223
        %v225 = vmul.f32 %v224, %v224
        %v226 = vld [vmem:[#allocation7] sm:$0xff]
        %v227 = vadd.f32 %v226, %v225
        %228 = vst [vmem:[#allocation7] sm:$0xff] %v227
        // Predicated region
        $region41: #{tpu_custom_call.1} parent=27 // pred_check
          %p229 = pneg %p110
        $region42: #{tpu_custom_call.1} parent=27 // pred_check_branch
          %231 = sbr.rel (%p229) target = $region44
        $region43: #{tpu_custom_call.1} parent=27 // pred_region
          %s233 = ssub.s32 128, 128
          %234 = vsyncadd [#allocation4], %s233
          %s235 = smul.addr %s24, 128
          %s236 = scalar_lea.hbm %s2, %s235
          %s238 = sshll.u32 [#allocation7], 4
          %s239 = int_to_ptr.vmem [resolvable:$true] %s238
          %241 = dma.vmem_to_hbm [thread:$0]  %s239, 128, %s236, [#allocation4]
        $region44: #{tpu_custom_call.1} parent=27 // pred_fallthru
          _
        // Predicated region
        $region45: #{tpu_custom_call.1} parent=27 // pred_check
          %p242 = pneg %p110
        $region46: #{tpu_custom_call.1} parent=27 // pred_check_branch
          %244 = sbr.rel (%p242) target = $region48
        $region47: #{tpu_custom_call.1} parent=27 // pred_region
          %245 = dma.done [#allocation4], 128
        $region48: #{tpu_custom_call.1} parent=27 // pred_fallthru
          _
      $region28: #{tpu_custom_call.1} parent=5 // pred_fallthru
        _
      %p246 = scmp.le.s32.totalorder 2, %s15
      // Predicated region
      $region49: #{tpu_custom_call.1} parent=5 // pred_check
        %p247 = pneg %p246
      $region50: #{tpu_custom_call.1} parent=5 // pred_check_branch
        %249 = sbr.rel (%p247) target = $region52
      $region51: #{tpu_custom_call.1} parent=5 // pred_region
        %s250 = ssub.s32 %s15, 2
      $region52: #{tpu_custom_call.1} parent=5 // pred_fallthru
        _
    $region6: #{tpu_custom_call.1} parent=1 // loop_footer
      %s19 = sadd.s32 1, %s15
    $region7: #{tpu_custom_call.1} parent=1 // loop_footer_branch
      %14 = sbr.rel target = $region3
    $region8: #{tpu_custom_call.1} parent=1 // loop_exit
      _
    %251 = vsyncpa [#allocation3], 1
    %s252 = scalar_lea.sflag [#allocation3], 1
    %253 = vsyncpa %s252, 1
    %254 = vsyncpa [#allocation6], 1
    %s255 = scalar_lea.sflag [#allocation6], 1
    %256 = vsyncpa %s255, 1
    %257 = vsyncpa [#allocation4], 1
    %s258 = scalar_lea.sflag [#allocation4], 1
    %259 = vsyncpa %s258, 1

</llo_original>
